<compile_context>
chip_gen: v5e
topology: v5e:2x2
jax: 0.10.0
libtpu: 0.0.40
codegen_flags: <defaults>
</compile_context>

<pallas_src>
import jax
import jax.numpy as jnp
from jax.experimental import pallas as pl
from jax.experimental.pallas import tpu as pltpu

_W_IN = 512                      # input lanes per row (256 samples, features interleaved)
_W_OUT = _W_IN // 2              # output lanes per row (= samples per row)
_ROW_ALIGN = 8                   # sublane granularity
_SAMPLES_PER_BLOCK = _W_OUT * _ROW_ALIGN   # 2048 samples -> rows stay a multiple of 8
_DEFAULT_TILE_ROWS = 2048        # 4 MiB f32 input tile per grid step


def _logistic_kernel(params_ref, sel_ref, x_ref, o_ref):
    # params_ref: SMEM (3,) f32 = [w0, w1, b]
    # sel_ref:    VMEM (_W_IN, _W_OUT) bf16 0/1 pair-selection matrix (S[2j,j]=S[2j+1,j]=1)
    # x_ref:      VMEM (tile_rows, _W_IN) f32, features interleaved along lanes
    # o_ref:      VMEM (tile_rows, _W_OUT) f32, compact per-sample probabilities
    w0 = params_ref[0]
    w1 = params_ref[1]
    b = params_ref[2]

    # Lane-periodic weight vector [w0, w1, w0, w1, ...]; applied exactly in f32 on the VPU.
    lane = jax.lax.broadcasted_iota(jnp.int32, (1, _W_IN), 1)
    w_lane = jnp.where(lane % 2 == 0, w0, w1)            # (1, _W_IN) f32
    p = x_ref[...] * w_lane                               # p[r, 2j]=w0*x0, p[r, 2j+1]=w1*x1

    # Pairwise sum + lane compaction on the MXU with an exact 0/1 matrix.
    # hi/lo bf16 split keeps the result f32-accurate at full bf16 MXU rate.
    p_hi = p.astype(jnp.bfloat16)
    p_lo = (p - p_hi.astype(jnp.float32)).astype(jnp.bfloat16)
    sel = sel_ref[...]
    z = jnp.dot(p_hi, sel, preferred_element_type=jnp.float32)
    z = z + jnp.dot(p_lo, sel, preferred_element_type=jnp.float32)
    z = z + b

    # Exact, numerically stable sigmoid: one EUP transcendental, no reciprocal.
    o_ref[...] = 0.5 * jnp.tanh(0.5 * z) + 0.5


def _pair_select_matrix():
    # (512, 256) bf16, S[i, j] = 1 iff i // 2 == j.  0/1 entries are exact in bf16.
    i = jnp.arange(_W_IN)[:, None]
    j = jnp.arange(_W_OUT)[None, :]
    return ((i // 2) == j).astype(jnp.bfloat16)


def _pallas_main(x_main, w, b, tile_rows):
    """Pallas path for the aligned prefix: n_main is a multiple of _SAMPLES_PER_BLOCK."""
    n_main = x_main.shape[0]
    rows = (n_main * 2) // _W_IN                       # multiple of 8 by construction
    x2d = x_main.reshape(rows, _W_IN)                   # free reshape of the contiguous buffer

    tile_rows = max(_ROW_ALIGN, (min(tile_rows, rows) // _ROW_ALIGN) * _ROW_ALIGN)
    grid = (pl.cdiv(rows, tile_rows),)

    params = jnp.concatenate([w, b])                    # (3,) f32 -> SMEM scalars
    sel = _pair_select_matrix()                         # resident in VMEM (constant block)

    out = pl.pallas_call(
        _logistic_kernel,
        out_shape=jax.ShapeDtypeStruct((rows, _W_OUT), jnp.float32),
        grid=grid,
        in_specs=[
            pl.BlockSpec(memory_space=pltpu.MemorySpace.SMEM),       # [w0, w1, b]
            pl.BlockSpec((_W_IN, _W_OUT), lambda i: (0, 0)),         # selection matrix
            pl.BlockSpec((tile_rows, _W_IN), lambda i: (i, 0)),      # interleaved input rows
        ],
        out_specs=pl.BlockSpec((tile_rows, _W_OUT), lambda i: (i, 0)),
        compiler_params=pltpu.CompilerParams(
            dimension_semantics=("parallel",),          # independent row blocks
            vmem_limit_bytes=32 * 1024 * 1024,
        ),
    )(params, sel, x2d)

    # (rows, 256) row-major == sample order -> free reshape to (n_main, 1).
    return out.reshape(n_main, 1)


def binary_classifier_forward(x, weight, bias, *, tile_rows=_DEFAULT_TILE_ROWS):
    """Forward pass of BinaryClassifier: sigmoid(x @ W^T + b), output (N, 1)."""
    n = x.shape[0]
    x = x.astype(jnp.float32)
    w = weight.astype(jnp.float32).reshape(-1)           # (2,)
    b = bias.astype(jnp.float32).reshape(-1)              # (1,)

    n_main = (n // _SAMPLES_PER_BLOCK) * _SAMPLES_PER_BLOCK
    parts = []
    if n_main > 0:
        x_main = x if n_main == n else x[:n_main]
        parts.append(_pallas_main(x_main, w, b, tile_rows))
    if n_main < n:
        # Tiny ragged tail (< 2048 samples): fused XLA epilogue, exact f32 math.
        x_tail = x[n_main:]
        z_tail = x_tail[:, 0:1] * w[0] + x_tail[:, 1:2] * w[1] + b[0]
        parts.append(jax.nn.sigmoid(z_tail))
    if len(parts) == 1:
        return parts[0]
    return jnp.concatenate(parts, axis=0)


def _reference(x, weight, bias):
    """Exact elementwise reference (avoids any matmul precision question)."""
    x = x.astype(jnp.float32)
    w = weight.astype(jnp.float32).reshape(-1)
    b = bias.astype(jnp.float32).reshape(-1)
    z = x[:, 0:1] * w[0] + x[:, 1:2] * w[1] + b[0]
    return jax.nn.sigmoid(z)


def init_params(key):
    # nn.Linear(2, 1) shapes with PyTorch's default U(-1/sqrt(fan_in), +) init.
    k_w, k_b = jax.random.split(key)
    bound = 1.0 / jnp.sqrt(2.0)
    weight = jax.random.uniform(k_w, (1, 2), jnp.float32, -bound, bound)
    bias = jax.random.uniform(k_b, (1,), jnp.float32, -bound, bound)
    return weight, bias


if __name__ == "__main__":
    key = jax.random.PRNGKey(0)
    k_x1, k_x2, k_x3, k_p = jax.random.split(key, 4)
    weight, bias = init_params(k_p)

    # 1) Aligned batch, default tile (single grid step).
    n1 = 4096
    x1 = jax.random.normal(k_x1, (n1, 2), jnp.float32)
    out1 = jax.block_until_ready(binary_classifier_forward(x1, weight, bias))
    ref1 = _reference(x1, weight, bias)
    assert out1.shape == (n1, 1)
    assert jnp.allclose(out1, ref1, atol=1e-4), "aligned-batch mismatch"

    # 2) Same batch with a small tile -> multi-step grid (exercises pipelining).
    out2 = jax.block_until_ready(
        binary_classifier_forward(x1, weight, bias, tile_rows=8))
    assert jnp.allclose(out2, ref1, atol=1e-4), "multi-step grid mismatch"

    # 3) Ragged batch: 4096 samples through Pallas + 904-sample XLA epilogue.
    n3 = 5000
    x3 = jax.random.normal(k_x2, (n3, 2), jnp.float32)
    out3 = jax.block_until_ready(binary_classifier_forward(x3, weight, bias))
    ref3 = _reference(x3, weight, bias)
    assert out3.shape == (n3, 1)
    assert jnp.allclose(out3, ref3, atol=1e-4), "ragged-batch mismatch"

    # 4) Tiny batch: entirely on the fused XLA fallback path.
    n4 = 8
    x4 = jax.random.normal(k_x3, (n4, 2), jnp.float32)
    out4 = jax.block_until_ready(binary_classifier_forward(x4, weight, bias))
    ref4 = _reference(x4, weight, bias)
    assert out4.shape == (n4, 1)
    assert jnp.allclose(out4, ref4, atol=1e-5), "tiny-batch mismatch"

    print("KERNEL_OK")
</pallas_src>

<mosaic_0001>
module attributes {stable_mosaic.version = 11 : i64} {
  func.func @_logistic_kernel(%arg0: i32, %arg1: memref<3xf32, #tpu.memory_space<smem>>, %arg2: memref<512x256xbf16, #tpu.memory_space<vmem>>, %arg3: memref<16x512xf32, #tpu.memory_space<vmem>>, %arg4: memref<16x256xf32, #tpu.memory_space<vmem>>) attributes {dimension_semantics = [#tpu.dimension_semantics<parallel>], iteration_bounds = array<i64: 1>, scalar_prefetch = 0 : i64, scratch_operands = 0 : i64, tpu.core_type = #tpu.core_type<tc>, window_params = [{transform_indices = @transform_0, window_bounds = array<i64: 3>}, {pipeline_mode = #tpu.pipeline_mode<synchronous>, transform_indices = @transform_1, window_bounds = array<i64: 512, 256>}, {transform_indices = @transform_2, window_bounds = array<i64: 16, 512>}, {transform_indices = @transform_3, window_bounds = array<i64: 16, 256>}]} {
    %c0 = arith.constant 0 : index
    %0 = memref.load %arg1[%c0] : memref<3xf32, #tpu.memory_space<smem>>
    %c1 = arith.constant 1 : index
    %1 = memref.load %arg1[%c1] : memref<3xf32, #tpu.memory_space<smem>>
    %c2 = arith.constant 2 : index
    %2 = memref.load %arg1[%c2] : memref<3xf32, #tpu.memory_space<smem>>
    %3 = tpu.iota {dimensions = array<i32: 1>} : vector<1x512xi32>
    %c2_i32 = arith.constant 2 : i32
    %c0_i32 = arith.constant 0 : i32
    %4 = arith.cmpi eq, %c2_i32, %c0_i32 : i32
    %c1_i32 = arith.constant 1 : i32
    %5 = arith.select %4, %c1_i32, %c2_i32 : i32
    %6 = vector.broadcast %5 : i32 to vector<1x512xi32>
    %7 = arith.remsi %3, %6 : vector<1x512xi32>
    %c0_i32_0 = arith.constant 0 : i32
    %8 = vector.broadcast %c0_i32_0 : i32 to vector<1x512xi32>
    %9 = arith.cmpi ne, %7, %8 : vector<1x512xi32>
    %c0_i32_1 = arith.constant 0 : i32
    %10 = vector.broadcast %c0_i32_1 : i32 to vector<1x512xi32>
    %11 = arith.cmpi slt, %7, %10 : vector<1x512xi32>
    %c0_i32_2 = arith.constant 0 : i32
    %12 = arith.cmpi slt, %5, %c0_i32_2 : i32
    %13 = vector.broadcast %12 : i1 to vector<1x512xi1>
    %14 = vector.broadcast %13 : vector<1x512xi1> to vector<1x512xi1>
    %15 = arith.xori %11, %14 : vector<1x512xi1>
    %16 = arith.andi %15, %9 : vector<1x512xi1>
    %17 = vector.broadcast %5 : i32 to vector<1x512xi32>
    %18 = arith.addi %7, %17 : vector<1x512xi32>
    %19 = arith.select %16, %18, %7 : vector<1x512xi1>, vector<1x512xi32>
    %c0_i32_3 = arith.constant 0 : i32
    %20 = vector.broadcast %c0_i32_3 : i32 to vector<1x512xi32>
    %21 = arith.cmpi eq, %19, %20 : vector<1x512xi32>
    %22 = vector.broadcast %0 : f32 to vector<1x512xf32>
    %23 = vector.broadcast %1 : f32 to vector<1x512xf32>
    %24 = arith.select %21, %22, %23 : vector<1x512xi1>, vector<1x512xf32>
    %c0_4 = arith.constant 0 : index
    %c0_5 = arith.constant 0 : index
    %25 = vector.load %arg3[%c0_4, %c0_5] : memref<16x512xf32, #tpu.memory_space<vmem>>, vector<16x512xf32>
    %26 = vector.broadcast %24 : vector<1x512xf32> to vector<16x512xf32>
    %27 = arith.mulf %25, %26 : vector<16x512xf32>
    %28 = arith.truncf %27 : vector<16x512xf32> to vector<16x512xbf16>
    %29 = arith.extf %28 : vector<16x512xbf16> to vector<16x512xf32>
    %30 = arith.subf %27, %29 : vector<16x512xf32>
    %31 = arith.truncf %30 : vector<16x512xf32> to vector<16x512xbf16>
    %c0_6 = arith.constant 0 : index
    %c0_7 = arith.constant 0 : index
    %32 = vector.load %arg2[%c0_6, %c0_7] : memref<512x256xbf16, #tpu.memory_space<vmem>>, vector<512x256xbf16>
    %cst = arith.constant dense<0.000000e+00> : vector<16x256xf32>
    %33 = tpu.matmul %28, %32, %cst {dimension_numbers = #tpu.dot_dimension_numbers<[1], [0], [0], [1], [0, 0, 1, 1], [], []>} : vector<16x512xbf16>, vector<512x256xbf16>, vector<16x256xf32> -> vector<16x256xf32>
    %cst_8 = arith.constant dense<0.000000e+00> : vector<16x256xf32>
    %34 = tpu.matmul %31, %32, %cst_8 {dimension_numbers = #tpu.dot_dimension_numbers<[1], [0], [0], [1], [0, 0, 1, 1], [], []>} : vector<16x512xbf16>, vector<512x256xbf16>, vector<16x256xf32> -> vector<16x256xf32>
    %35 = arith.addf %33, %34 : vector<16x256xf32>
    %36 = vector.broadcast %2 : f32 to vector<16x256xf32>
    %37 = arith.addf %35, %36 : vector<16x256xf32>
    %cst_9 = arith.constant 5.000000e-01 : f32
    %38 = vector.broadcast %cst_9 : f32 to vector<16x256xf32>
    %39 = arith.mulf %38, %37 : vector<16x256xf32>
    %40 = math.tanh %39 : vector<16x256xf32>
    %cst_10 = arith.constant 5.000000e-01 : f32
    %41 = vector.broadcast %cst_10 : f32 to vector<16x256xf32>
    %42 = arith.mulf %41, %40 : vector<16x256xf32>
    %cst_11 = arith.constant 5.000000e-01 : f32
    %43 = vector.broadcast %cst_11 : f32 to vector<16x256xf32>
    %44 = arith.addf %42, %43 : vector<16x256xf32>
    %c0_12 = arith.constant 0 : index
    %c0_13 = arith.constant 0 : index
    %45 = vector.load %arg4[%c0_12, %c0_13] : memref<16x256xf32, #tpu.memory_space<vmem>>, vector<16x256xf32>
    tpu.vector_store %arg4[%c0_12, %c0_13], %44 {strides = array<i32>} : memref<16x256xf32, #tpu.memory_space<vmem>>, vector<16x256xf32>,
    return
  }
  func.func @transform_0(%arg0: i32) -> i32 {
    %c0_i32 = arith.constant 0 : i32
    %c0_i32_0 = arith.constant 0 : i32
    return %c0_i32 : i32
  }
  func.func @transform_1(%arg0: i32) -> (i32, i32) {
    %c0_i32 = arith.constant 0 : i32
    %c0_i32_0 = arith.constant 0 : i32
    %c0_i32_1 = arith.constant 0 : i32
    return %c0_i32, %c0_i32_0 : i32, i32
  }
  func.func @transform_2(%arg0: i32) -> (i32, i32) {
    %c0_i32 = arith.constant 0 : i32
    %c0_i32_0 = arith.constant 0 : i32
    return %arg0, %c0_i32 : i32, i32
  }
  func.func @transform_3(%arg0: i32) -> (i32, i32) {
    %c0_i32 = arith.constant 0 : i32
    %c0_i32_0 = arith.constant 0 : i32
    return %arg0, %c0_i32 : i32, i32
  }
}

</mosaic_0001>

<llo_original>
// kernel: tpu_custom_call.1
$region0: #{tpu_custom_call.1}
  #allocation0 [shape = 'u32[]', space=smem, size = 0x4, offset = 0x4, fixed_abs, tag = 'smem constant byte address 0x4 - core index']
  #allocation1 [shape = 'u32[72,128]{1,0:T(1,128)}', space=vmem, size = 0x9000, scoped, tag = 'internal scratch']
  %s0 = inlined_call_operand.hbm [shape: f32[3], index: 0, kind: input, shape index: {}]
  %s1 = inlined_call_operand.hbm [shape: bf16[512,256], index: 1, kind: input, shape index: {}]
  %s2 = inlined_call_operand.hbm [shape: f32[16,512], index: 2, kind: input, shape index: {}]
  %s3 = inlined_call_operand.hbm [shape: f32[16,256], index: 3, kind: output, shape index: {}]
  %s4 = sld [smem:[#allocation0]]
  $region34: #{tpu_custom_call.1} parent=0
    _
  %s6 = ssub.s32 1, %s4
  %s7 = scalar_select 0, %s6, %s4
  $region1: #{tpu_custom_call.1} parent=0
    #allocation2 [shape = 'u8[512]{0}', space=smem, size = 0x200, scoped, tag = 'input window, operand 0, single buffered']
    #allocation3 [shape = 's32[1]{0}', space=sflag, size = 0x4, scoped, tag = 'scoped memory for tpu_custom_call.1']
    #allocation4 [shape = 's32[1]{0}', space=sflag, size = 0x4, scoped, tag = 'scoped memory for tpu_custom_call.1']
    #allocation5 [shape = 's32[1]{0}', space=sflag, size = 0x4, scoped, tag = 'scoped memory for tpu_custom_call.1']
    #allocation6 [shape = 'u8[262144]{0}', space=vmem, size = 0x40000, scoped, tag = 'input window, operand 1, single buffered']
    #allocation7 [shape = 'u8[32768]{0}', space=vmem, size = 0x8000, scoped, tag = 'input window, operand 2, single buffered']
    #allocation8 [shape = 's32[1]{0}', space=sflag, size = 0x4, scoped, tag = 'scoped memory for tpu_custom_call.1']
    #allocation9 [shape = 'u8[16384]{0}', space=vmem, size = 0x4000, scoped, tag = 'output window, operand 0, single buffered']
    %8 = vsyncpa [#allocation5], 0
    %9 = vsyncpa [#allocation3], 0
    %10 = vsyncpa [#allocation8], 0
    %11 = vsyncpa [#allocation4], 0
    // Predicated region
    $region2: #{tpu_custom_call.1} parent=1 // pred_check
      _
    $region3: #{tpu_custom_call.1} parent=1 // pred_check_branch
      %13 = sbr.rel (0) target = $region5
    $region4: #{tpu_custom_call.1} parent=1 // pred_region
      %15 = vsyncadd [#allocation5], 0
      %s17 = sshll.u32 %s0, 4
      %s18 = int_to_ptr.hbm [resolvable:$true] %s17
      %20 = dma.hbm_to_smem %s18, 16, [#allocation2], [#allocation5]
    $region5: #{tpu_custom_call.1} parent=1 // pred_fallthru
      _
    // Predicated region
    $region6: #{tpu_custom_call.1} parent=1 // pred_check
      _
    $region7: #{tpu_custom_call.1} parent=1 // pred_check_branch
      %22 = sbr.rel (0) target = $region9
    $region8: #{tpu_custom_call.1} parent=1 // pred_region
      %24 = vsyncadd [#allocation3], 0
      %s25 = sshll.u32 %s1, 4
      %s26 = int_to_ptr.hbm [resolvable:$true] %s25
      %s27 = sshll.u32 [#allocation6], 4
      %s28 = int_to_ptr.vmem [resolvable:$true] %s27
      %33 = dma.hbm_to_vmem [thread:$0]  %s26, 8192, %s28, [#allocation3], 128, 128, 8
    $region9: #{tpu_custom_call.1} parent=1 // pred_fallthru
      _
    // Predicated region
    $region10: #{tpu_custom_call.1} parent=1 // pred_check
      _
    $region11: #{tpu_custom_call.1} parent=1 // pred_check_branch
      %35 = sbr.rel (0) target = $region13
    $region12: #{tpu_custom_call.1} parent=1 // pred_region
      %37 = vsyncadd [#allocation8], 0
      %s38 = sshll.u32 %s2, 4
      %s39 = int_to_ptr.hbm [resolvable:$true] %s38
      %s40 = sshll.u32 [#allocation7], 4
      %s41 = int_to_ptr.vmem [resolvable:$true] %s40
      %46 = dma.hbm_to_vmem [thread:$0]  %s39, 1024, %s41, [#allocation8], 512, 512, 32
    $region13: #{tpu_custom_call.1} parent=1 // pred_fallthru
      _
    // Predicated region
    $region14: #{tpu_custom_call.1} parent=1 // pred_check
      _
    $region15: #{tpu_custom_call.1} parent=1 // pred_check_branch
      %48 = sbr.rel (0) target = $region17
    $region16: #{tpu_custom_call.1} parent=1 // pred_region
      %50 = dma.done [#allocation5], 16
    $region17: #{tpu_custom_call.1} parent=1 // pred_fallthru
      _
    // Predicated region
    $region18: #{tpu_custom_call.1} parent=1 // pred_check
      _
    $region19: #{tpu_custom_call.1} parent=1 // pred_check_branch
      %52 = sbr.rel (0) target = $region21
    $region20: #{tpu_custom_call.1} parent=1 // pred_region
      %54 = dma.done [#allocation3], 8192
    $region21: #{tpu_custom_call.1} parent=1 // pred_fallthru
      _
    // Predicated region
    $region22: #{tpu_custom_call.1} parent=1 // pred_check
      _
    $region23: #{tpu_custom_call.1} parent=1 // pred_check_branch
      %56 = sbr.rel (0) target = $region25
    $region24: #{tpu_custom_call.1} parent=1 // pred_region
      %58 = dma.done [#allocation8], 1024
    $region25: #{tpu_custom_call.1} parent=1 // pred_fallthru
      _
    %59 = sfence
    %s60 = sld [smem:[#allocation2]]
    %s61 = sld [smem:[#allocation2 + $0x1]]
    %s62 = sld [smem:[#allocation2 + $0x2]]
    %v63 = vlaneseq
    %v64 = vand.u32 %v63, 127
    %v65 = vadd.s32 %v64, 128
    %v66 = vadd.s32 %v64, 256
    %v67 = vadd.s32 %v64, 384
    %vm68 = vcmp.lt.s32.totalorder %v64, 0
    %v69 = vsub.s32 0, %v64
    %v70 = vsel %vm68, %v69, %v64
    %v71 = vshrl.u32 %v70, 1
    %v72 = vand.u32 %v70, 1
    %v73 = vsub.s32 0, %v72
    %v74 = vsel %vm68, %v73, %v72
    %vm75 = vcmp.lt.s32.totalorder %v65, 0
    %v76 = vsub.s32 0, %v65
    %v77 = vsel %vm75, %v76, %v65
    %v78 = vshrl.u32 %v77, 1
    %v79 = vand.u32 %v77, 1
    %v80 = vsub.s32 0, %v79
    %v81 = vsel %vm75, %v80, %v79
    %vm82 = vcmp.lt.s32.totalorder %v66, 0
    %v83 = vsub.s32 0, %v66
    %v84 = vsel %vm82, %v83, %v66
    %v85 = vshrl.u32 %v84, 1
    %v86 = vand.u32 %v84, 1
    %v87 = vsub.s32 0, %v86
    %v88 = vsel %vm82, %v87, %v86
    %vm89 = vcmp.lt.s32.totalorder %v67, 0
    %v90 = vsub.s32 0, %v67
    %v91 = vsel %vm89, %v90, %v67
    %v92 = vshrl.u32 %v91, 1
    %v93 = vand.u32 %v91, 1
    %v94 = vsub.s32 0, %v93
    %v95 = vsel %vm89, %v94, %v93
    %vm96 = vcmp.ne.s32.totalorder %v74, 0
    %vm97 = vcmp.ne.s32.totalorder %v81, 0
    %vm98 = vcmp.ne.s32.totalorder %v88, 0
    %vm99 = vcmp.ne.s32.totalorder %v95, 0
    %vm100 = vcmp.lt.s32.totalorder %v74, 0
    %vm101 = vcmp.lt.s32.totalorder %v81, 0
    %vm102 = vcmp.lt.s32.totalorder %v88, 0
    %vm103 = vcmp.lt.s32.totalorder %v95, 0
    %vm104 = vmand %vm100, %vm96
    %vm105 = vmand %vm101, %vm97
    %vm106 = vmand %vm102, %vm98
    %vm107 = vmand %vm103, %vm99
    %v108 = vadd.s32 %v74, 2
    %v109 = vadd.s32 %v81, 2
    %v110 = vadd.s32 %v88, 2
    %v111 = vadd.s32 %v95, 2
    %v112 = vsel %vm104, %v108, %v74
    %v113 = vsel %vm105, %v109, %v81
    %v114 = vsel %vm106, %v110, %v88
    %v115 = vsel %vm107, %v111, %v95
    %vm116 = vcmp.eq.s32.totalorder %v112, 0
    %vm117 = vcmp.eq.s32.totalorder %v113, 0
    %vm118 = vcmp.eq.s32.totalorder %v114, 0
    %vm119 = vcmp.eq.s32.totalorder %v115, 0
    %v120 = vstv %s60
    %v121 = vstv %s61
    %v122 = vsel %vm116, %v120, %v121
    %v123 = vsel %vm117, %v120, %v121
    %v124 = vsel %vm118, %v120, %v121
    %v125 = vsel %vm119, %v120, %v121
    %v126 = vld [vmem:[#allocation7] sm:$0xff]
    %v127 = vld [vmem:[#allocation7 + $0x8] sm:$0xff]
    %v128 = vld [vmem:[#allocation7 + $0x10] sm:$0xff]
    %v129 = vld [vmem:[#allocation7 + $0x18] sm:$0xff]
    %v130 = vld [vmem:[#allocation7 + $0x20] sm:$0xff]
    %v131 = vld [vmem:[#allocation7 + $0x28] sm:$0xff]
    %v132 = vld [vmem:[#allocation7 + $0x30] sm:$0xff]
    %v133 = vld [vmem:[#allocation7 + $0x38] sm:$0xff]
    %v134 = vmul.f32 %v126, %v122
    %v135 = vmul.f32 %v127, %v123
    %v136 = vmul.f32 %v128, %v124
    %v137 = vmul.f32 %v129, %v125
    %v138 = vmul.f32 %v130, %v122
    %v139 = vmul.f32 %v131, %v123
    %v140 = vmul.f32 %v132, %v124
    %v141 = vmul.f32 %v133, %v125
    %v142 = vpack.c.bf16 %v135, %v134
    %v143 = vpack.c.bf16 %v137, %v136
    %v144 = vpack.c.bf16 %v139, %v138
    %v145 = vpack.c.bf16 %v141, %v140
    %v146 = vunpack.c.l.bf16 %v142
    %v147 = vunpack.c.h.bf16 %v142
    %v148 = vunpack.c.l.bf16 %v143
    %v149 = vunpack.c.h.bf16 %v143
    %v150 = vunpack.c.l.bf16 %v144
    %v151 = vunpack.c.h.bf16 %v144
    %v152 = vunpack.c.l.bf16 %v145
    %v153 = vunpack.c.h.bf16 %v145
    %v154 = vsub.f32 %v134, %v146
    %v155 = vsub.f32 %v135, %v147
    %v156 = vsub.f32 %v136, %v148
    %v157 = vsub.f32 %v137, %v149
    %v158 = vsub.f32 %v138, %v150
    %v159 = vsub.f32 %v139, %v151
    %v160 = vsub.f32 %v140, %v152
    %v161 = vsub.f32 %v141, %v153
    %v162 = vpack.c.bf16 %v158, %v154
    %v163 = vpack.c.bf16 %v159, %v155
    %v164 = vpack.c.bf16 %v160, %v156
    %v165 = vpack.c.bf16 %v161, %v157
    %v166 = vld [vmem:[#allocation6] sm:$0xff]
    %v167 = vld [vmem:[#allocation6 + $0x8] sm:$0xff]
    %v168 = vld [vmem:[#allocation6 + $0x10] sm:$0xff]
    %v169 = vld [vmem:[#allocation6 + $0x18] sm:$0xff]
    %v170 = vld [vmem:[#allocation6 + $0x20] sm:$0xff]
    %v171 = vld [vmem:[#allocation6 + $0x28] sm:$0xff]
    %v172 = vld [vmem:[#allocation6 + $0x30] sm:$0xff]
    %v173 = vld [vmem:[#allocation6 + $0x38] sm:$0xff]
    %v174 = vld [vmem:[#allocation6 + $0x40] sm:$0xff]
    %v175 = vld [vmem:[#allocation6 + $0x48] sm:$0xff]
    %v176 = vld [vmem:[#allocation6 + $0x50] sm:$0xff]
    %v177 = vld [vmem:[#allocation6 + $0x58] sm:$0xff]
    %v178 = vld [vmem:[#allocation6 + $0x60] sm:$0xff]
    %v179 = vld [vmem:[#allocation6 + $0x68] sm:$0xff]
    %v180 = vld [vmem:[#allocation6 + $0x70] sm:$0xff]
    %v181 = vld [vmem:[#allocation6 + $0x78] sm:$0xff]
    %v182 = vld [vmem:[#allocation6 + $0x80] sm:$0xff]
    %v183 = vld [vmem:[#allocation6 + $0x88] sm:$0xff]
    %v184 = vld [vmem:[#allocation6 + $0x90] sm:$0xff]
    %v185 = vld [vmem:[#allocation6 + $0x98] sm:$0xff]
    %v186 = vld [vmem:[#allocation6 + $0xa0] sm:$0xff]
    %v187 = vld [vmem:[#allocation6 + $0xa8] sm:$0xff]
    %v188 = vld [vmem:[#allocation6 + $0xb0] sm:$0xff]
    %v189 = vld [vmem:[#allocation6 + $0xb8] sm:$0xff]
    %v190 = vld [vmem:[#allocation6 + $0xc0] sm:$0xff]
    %v191 = vld [vmem:[#allocation6 + $0xc8] sm:$0xff]
    %v192 = vld [vmem:[#allocation6 + $0xd0] sm:$0xff]
    %v193 = vld [vmem:[#allocation6 + $0xd8] sm:$0xff]
    %v194 = vld [vmem:[#allocation6 + $0xe0] sm:$0xff]
    %v195 = vld [vmem:[#allocation6 + $0xe8] sm:$0xff]
    %v196 = vld [vmem:[#allocation6 + $0xf0] sm:$0xff]
    %v197 = vld [vmem:[#allocation6 + $0xf8] sm:$0xff]
    %v198 = vld [vmem:[#allocation6 + $0x100] sm:$0xff]
    %v199 = vld [vmem:[#allocation6 + $0x108] sm:$0xff]
    %v200 = vld [vmem:[#allocation6 + $0x110] sm:$0xff]
    %v201 = vld [vmem:[#allocation6 + $0x118] sm:$0xff]
    %v202 = vld [vmem:[#allocation6 + $0x120] sm:$0xff]
    %v203 = vld [vmem:[#allocation6 + $0x128] sm:$0xff]
    %v204 = vld [vmem:[#allocation6 + $0x130] sm:$0xff]
    %v205 = vld [vmem:[#allocation6 + $0x138] sm:$0xff]
    %v206 = vld [vmem:[#allocation6 + $0x140] sm:$0xff]
    %v207 = vld [vmem:[#allocation6 + $0x148] sm:$0xff]
    %v208 = vld [vmem:[#allocation6 + $0x150] sm:$0xff]
    %v209 = vld [vmem:[#allocation6 + $0x158] sm:$0xff]
    %v210 = vld [vmem:[#allocation6 + $0x160] sm:$0xff]
    %v211 = vld [vmem:[#allocation6 + $0x168] sm:$0xff]
    %v212 = vld [vmem:[#allocation6 + $0x170] sm:$0xff]
    %v213 = vld [vmem:[#allocation6 + $0x178] sm:$0xff]
    %v214 = vld [vmem:[#allocation6 + $0x180] sm:$0xff]
    %v215 = vld [vmem:[#allocation6 + $0x188] sm:$0xff]
    %v216 = vld [vmem:[#allocation6 + $0x190] sm:$0xff]
    %v217 = vld [vmem:[#allocation6 + $0x198] sm:$0xff]
    %v218 = vld [vmem:[#allocation6 + $0x1a0] sm:$0xff]
    %v219 = vld [vmem:[#allocation6 + $0x1a8] sm:$0xff]
    %v220 = vld [vmem:[#allocation6 + $0x1b0] sm:$0xff]
    %v221 = vld [vmem:[#allocation6 + $0x1b8] sm:$0xff]
    %v222 = vld [vmem:[#allocation6 + $0x1c0] sm:$0xff]
    %v223 = vld [vmem:[#allocation6 + $0x1c8] sm:$0xff]
    %v224 = vld [vmem:[#allocation6 + $0x1d0] sm:$0xff]
    %v225 = vld [vmem:[#allocation6 + $0x1d8] sm:$0xff]
    %v226 = vld [vmem:[#allocation6 + $0x1e0] sm:$0xff]
    %v227 = vld [vmem:[#allocation6 + $0x1e8] sm:$0xff]
    %v228 = vld [vmem:[#allocation6 + $0x1f0] sm:$0xff]
    %v229 = vld [vmem:[#allocation6 + $0x1f8] sm:$0xff]
    %v294 = vunpack.c.l.b16 %v166
    %v295 = vunpack.c.h.b16 %v166
    %v296 = vunpack.c.l.b16 %v167
    %v297 = vunpack.c.h.b16 %v167
    %v298 = vunpack.c.l.b16 %v168
    %v299 = vunpack.c.h.b16 %v168
    %v300 = vunpack.c.l.b16 %v169
    %v301 = vunpack.c.h.b16 %v169
    %v302 = vunpack.c.l.b16 %v170
    %v303 = vunpack.c.h.b16 %v170
    %v304 = vunpack.c.l.b16 %v171
    %v305 = vunpack.c.h.b16 %v171
    %v306 = vunpack.c.l.b16 %v172
    %v307 = vunpack.c.h.b16 %v172
    %v308 = vunpack.c.l.b16 %v173
    %v309 = vunpack.c.h.b16 %v173
    %v310 = vunpack.c.l.b16 %v174
    %v311 = vunpack.c.h.b16 %v174
    %v312 = vunpack.c.l.b16 %v175
    %v313 = vunpack.c.h.b16 %v175
    %v314 = vunpack.c.l.b16 %v176
    %v315 = vunpack.c.h.b16 %v176
    %v316 = vunpack.c.l.b16 %v177
    %v317 = vunpack.c.h.b16 %v177
    %v318 = vunpack.c.l.b16 %v178
    %v319 = vunpack.c.h.b16 %v178
    %v320 = vunpack.c.l.b16 %v179
    %v321 = vunpack.c.h.b16 %v179
    %v322 = vunpack.c.l.b16 %v180
    %v323 = vunpack.c.h.b16 %v180
    %v324 = vunpack.c.l.b16 %v181
    %v325 = vunpack.c.h.b16 %v181
    %v326 = vunpack.c.l.b16 %v182
    %v327 = vunpack.c.h.b16 %v182
    %v328 = vunpack.c.l.b16 %v183
    %v329 = vunpack.c.h.b16 %v183
    %v330 = vunpack.c.l.b16 %v184
    %v331 = vunpack.c.h.b16 %v184
    %v332 = vunpack.c.l.b16 %v185
    %v333 = vunpack.c.h.b16 %v185
    %v334 = vunpack.c.l.b16 %v186
    %v335 = vunpack.c.h.b16 %v186
    %v336 = vunpack.c.l.b16 %v187
    %v337 = vunpack.c.h.b16 %v187
    %v338 = vunpack.c.l.b16 %v188
    %v339 = vunpack.c.h.b16 %v188
    %v340 = vunpack.c.l.b16 %v189
    %v341 = vunpack.c.h.b16 %v189
    %v342 = vunpack.c.l.b16 %v190
    %v343 = vunpack.c.h.b16 %v190
    %v344 = vunpack.c.l.b16 %v191
    %v345 = vunpack.c.h.b16 %v191
    %v346 = vunpack.c.l.b16 %v192
    %v347 = vunpack.c.h.b16 %v192
    %v348 = vunpack.c.l.b16 %v193
    %v349 = vunpack.c.h.b16 %v193
    %v350 = vunpack.c.l.b16 %v194
    %v351 = vunpack.c.h.b16 %v194
    %v352 = vunpack.c.l.b16 %v195
    %v353 = vunpack.c.h.b16 %v195
    %v354 = vunpack.c.l.b16 %v196
    %v355 = vunpack.c.h.b16 %v196
    %v356 = vunpack.c.l.b16 %v197
    %v357 = vunpack.c.h.b16 %v197
    %v358 = vunpack.c.l.b16 %v198
    %v359 = vunpack.c.h.b16 %v198
    %v360 = vunpack.c.l.b16 %v199
    %v361 = vunpack.c.h.b16 %v199
    %v362 = vunpack.c.l.b16 %v200
    %v363 = vunpack.c.h.b16 %v200
    %v364 = vunpack.c.l.b16 %v201
    %v365 = vunpack.c.h.b16 %v201
    %v366 = vunpack.c.l.b16 %v202
    %v367 = vunpack.c.h.b16 %v202
    %v368 = vunpack.c.l.b16 %v203
    %v369 = vunpack.c.h.b16 %v203
    %v370 = vunpack.c.l.b16 %v204
    %v371 = vunpack.c.h.b16 %v204
    %v372 = vunpack.c.l.b16 %v205
    %v373 = vunpack.c.h.b16 %v205
    %v374 = vunpack.c.l.b16 %v206
    %v375 = vunpack.c.h.b16 %v206
    %v376 = vunpack.c.l.b16 %v207
    %v377 = vunpack.c.h.b16 %v207
    %v378 = vunpack.c.l.b16 %v208
    %v379 = vunpack.c.h.b16 %v208
    %v380 = vunpack.c.l.b16 %v209
    %v381 = vunpack.c.h.b16 %v209
    %v382 = vunpack.c.l.b16 %v210
    %v383 = vunpack.c.h.b16 %v210
    %v384 = vunpack.c.l.b16 %v211
    %v385 = vunpack.c.h.b16 %v211
    %v386 = vunpack.c.l.b16 %v212
    %v387 = vunpack.c.h.b16 %v212
    %v388 = vunpack.c.l.b16 %v213
    %v389 = vunpack.c.h.b16 %v213
    %v390 = vunpack.c.l.b16 %v214
    %v391 = vunpack.c.h.b16 %v214
    %v392 = vunpack.c.l.b16 %v215
    %v393 = vunpack.c.h.b16 %v215
    %v394 = vunpack.c.l.b16 %v216
    %v395 = vunpack.c.h.b16 %v216
    %v396 = vunpack.c.l.b16 %v217
    %v397 = vunpack.c.h.b16 %v217
    %v398 = vunpack.c.l.b16 %v218
    %v399 = vunpack.c.h.b16 %v218
    %v400 = vunpack.c.l.b16 %v219
    %v401 = vunpack.c.h.b16 %v219
    %v402 = vunpack.c.l.b16 %v220
    %v403 = vunpack.c.h.b16 %v220
    %v404 = vunpack.c.l.b16 %v221
    %v405 = vunpack.c.h.b16 %v221
    %v406 = vunpack.c.l.b16 %v222
    %v407 = vunpack.c.h.b16 %v222
    %v408 = vunpack.c.l.b16 %v223
    %v409 = vunpack.c.h.b16 %v223
    %v410 = vunpack.c.l.b16 %v224
    %v411 = vunpack.c.h.b16 %v224
    %v412 = vunpack.c.l.b16 %v225
    %v413 = vunpack.c.h.b16 %v225
    %v414 = vunpack.c.l.b16 %v226
    %v415 = vunpack.c.h.b16 %v226
    %v416 = vunpack.c.l.b16 %v227
    %v417 = vunpack.c.h.b16 %v227
    %v418 = vunpack.c.l.b16 %v228
    %v419 = vunpack.c.h.b16 %v228
    %v420 = vunpack.c.l.b16 %v229
    %v421 = vunpack.c.h.b16 %v229
    %v422 = vpack.c.b16 %v296, %v294
    %v423 = vpack.c.b16 %v297, %v295
    %v424 = vpack.c.b16 %v300, %v298
    %v425 = vpack.c.b16 %v301, %v299
    %v426 = vpack.c.b16 %v304, %v302
    %v427 = vpack.c.b16 %v305, %v303
    %v428 = vpack.c.b16 %v308, %v306
    %v429 = vpack.c.b16 %v309, %v307
    %v430 = vpack.c.b16 %v312, %v310
    %v431 = vpack.c.b16 %v313, %v311
    %v432 = vpack.c.b16 %v316, %v314
    %v433 = vpack.c.b16 %v317, %v315
    %v434 = vpack.c.b16 %v320, %v318
    %v435 = vpack.c.b16 %v321, %v319
    %v436 = vpack.c.b16 %v324, %v322
    %v437 = vpack.c.b16 %v325, %v323
    %v438 = vpack.c.b16 %v328, %v326
    %v439 = vpack.c.b16 %v329, %v327
    %v440 = vpack.c.b16 %v332, %v330
    %v441 = vpack.c.b16 %v333, %v331
    %v442 = vpack.c.b16 %v336, %v334
    %v443 = vpack.c.b16 %v337, %v335
    %v444 = vpack.c.b16 %v340, %v338
    %v445 = vpack.c.b16 %v341, %v339
    %v446 = vpack.c.b16 %v344, %v342
    %v447 = vpack.c.b16 %v345, %v343
    %v448 = vpack.c.b16 %v348, %v346
    %v449 = vpack.c.b16 %v349, %v347
    %v450 = vpack.c.b16 %v352, %v350
    %v451 = vpack.c.b16 %v353, %v351
    %v452 = vpack.c.b16 %v356, %v354
    %v453 = vpack.c.b16 %v357, %v355
    %v454 = vpack.c.b16 %v360, %v358
    %v455 = vpack.c.b16 %v361, %v359
    %v456 = vpack.c.b16 %v364, %v362
    %v457 = vpack.c.b16 %v365, %v363
    %v458 = vpack.c.b16 %v368, %v366
    %v459 = vpack.c.b16 %v369, %v367
    %v460 = vpack.c.b16 %v372, %v370
    %v461 = vpack.c.b16 %v373, %v371
    %v462 = vpack.c.b16 %v376, %v374
    %v463 = vpack.c.b16 %v377, %v375
    %v464 = vpack.c.b16 %v380, %v378
    %v465 = vpack.c.b16 %v381, %v379
    %v466 = vpack.c.b16 %v384, %v382
    %v467 = vpack.c.b16 %v385, %v383
    %v468 = vpack.c.b16 %v388, %v386
    %v469 = vpack.c.b16 %v389, %v387
    %v470 = vpack.c.b16 %v392, %v390
    %v471 = vpack.c.b16 %v393, %v391
    %v472 = vpack.c.b16 %v396, %v394
    %v473 = vpack.c.b16 %v397, %v395
    %v474 = vpack.c.b16 %v400, %v398
    %v475 = vpack.c.b16 %v401, %v399
    %v476 = vpack.c.b16 %v404, %v402
    %v477 = vpack.c.b16 %v405, %v403
    %v478 = vpack.c.b16 %v408, %v406
    %v479 = vpack.c.b16 %v409, %v407
    %v480 = vpack.c.b16 %v412, %v410
    %v481 = vpack.c.b16 %v413, %v411
    %v482 = vpack.c.b16 %v416, %v414
    %v483 = vpack.c.b16 %v417, %v415
    %v484 = vpack.c.b16 %v420, %v418
    %v485 = vpack.c.b16 %v421, %v419
    %550 = vmatpush.bf16.msra.mxu0 %v436
    %551 = vmatpush.bf16.msra.mxu0 %v434
    %552 = vmatpush.bf16.msra.mxu0 %v432
    %553 = vmatpush.bf16.msra.mxu0 %v430
    %554 = vmatpush.bf16.msra.mxu0 %v428
    %555 = vmatpush.bf16.msra.mxu0 %v426
    %556 = vmatpush.bf16.msra.mxu0 %v424
    %557 = vmatpush.bf16.msra.mxu0 %v422
    %558 = vmatmul.bf16.gmra.mxu0 %v162
    %v559 = vpop.f32.mrf.mxu0
    %v560 = vadd.f32 0.0, %v559
    %v561 = vpop.f32.mrf.mxu0
    %v562 = vadd.f32 0.0, %v561
    %563 = vdwg.mxu0
    %564 = vmatpush.bf16.msra.mxu0 %v452
    %565 = vmatpush.bf16.msra.mxu0 %v450
    %566 = vmatpush.bf16.msra.mxu0 %v448
    %567 = vmatpush.bf16.msra.mxu0 %v446
    %568 = vmatpush.bf16.msra.mxu0 %v444
    %569 = vmatpush.bf16.msra.mxu0 %v442
    %570 = vmatpush.bf16.msra.mxu0 %v440
    %571 = vmatpush.bf16.msra.mxu0 %v438
    %572 = vmatmul.bf16.gmra.mxu0 %v163
    %v573 = vpop.f32.mrf.mxu0
    %v574 = vadd.f32 %v560, %v573
    %v575 = vpop.f32.mrf.mxu0
    %v576 = vadd.f32 %v562, %v575
    %577 = vdwg.mxu0
    %578 = vmatpush.bf16.msra.mxu0 %v468
    %579 = vmatpush.bf16.msra.mxu0 %v466
    %580 = vmatpush.bf16.msra.mxu0 %v464
    %581 = vmatpush.bf16.msra.mxu0 %v462
    %582 = vmatpush.bf16.msra.mxu0 %v460
    %583 = vmatpush.bf16.msra.mxu0 %v458
    %584 = vmatpush.bf16.msra.mxu0 %v456
    %585 = vmatpush.bf16.msra.mxu0 %v454
    %586 = vmatmul.bf16.gmra.mxu0 %v164
    %v587 = vpop.f32.mrf.mxu0
    %v588 = vadd.f32 %v574, %v587
    %v589 = vpop.f32.mrf.mxu0
    %v590 = vadd.f32 %v576, %v589
    %591 = vdwg.mxu0
    %592 = vmatpush.bf16.msra.mxu0 %v484
    %593 = vmatpush.bf16.msra.mxu0 %v482
    %594 = vmatpush.bf16.msra.mxu0 %v480
    %595 = vmatpush.bf16.msra.mxu0 %v478
    %596 = vmatpush.bf16.msra.mxu0 %v476
    %597 = vmatpush.bf16.msra.mxu0 %v474
    %598 = vmatpush.bf16.msra.mxu0 %v472
    %599 = vmatpush.bf16.msra.mxu0 %v470
    %600 = vmatmul.bf16.gmra.mxu0 %v165
    %v601 = vpop.f32.mrf.mxu0
    %v602 = vadd.f32 %v588, %v601
    %v603 = vpop.f32.mrf.mxu0
    %v604 = vadd.f32 %v590, %v603
    %605 = vdwg.mxu0
    %606 = vmatpush.bf16.msra.mxu0 %v437
    %607 = vmatpush.bf16.msra.mxu0 %v435
    %608 = vmatpush.bf16.msra.mxu0 %v433
    %609 = vmatpush.bf16.msra.mxu0 %v431
    %610 = vmatpush.bf16.msra.mxu0 %v429
    %611 = vmatpush.bf16.msra.mxu0 %v427
    %612 = vmatpush.bf16.msra.mxu0 %v425
    %613 = vmatpush.bf16.msra.mxu0 %v423
    %614 = vmatmul.bf16.gmra.mxu0 %v162
    %v615 = vpop.f32.mrf.mxu0
    %v616 = vadd.f32 0.0, %v615
    %v617 = vpop.f32.mrf.mxu0
    %v618 = vadd.f32 0.0, %v617
    %619 = vdwg.mxu0
    %620 = vmatpush.bf16.msra.mxu0 %v453
    %621 = vmatpush.bf16.msra.mxu0 %v451
    %622 = vmatpush.bf16.msra.mxu0 %v449
    %623 = vmatpush.bf16.msra.mxu0 %v447
    %624 = vmatpush.bf16.msra.mxu0 %v445
    %625 = vmatpush.bf16.msra.mxu0 %v443
    %626 = vmatpush.bf16.msra.mxu0 %v441
    %627 = vmatpush.bf16.msra.mxu0 %v439
    %628 = vmatmul.bf16.gmra.mxu0 %v163
    %v629 = vpop.f32.mrf.mxu0
    %v630 = vadd.f32 %v616, %v629
    %v631 = vpop.f32.mrf.mxu0
    %v632 = vadd.f32 %v618, %v631
    %633 = vdwg.mxu0
    %634 = vmatpush.bf16.msra.mxu0 %v469
    %635 = vmatpush.bf16.msra.mxu0 %v467
    %636 = vmatpush.bf16.msra.mxu0 %v465
    %637 = vmatpush.bf16.msra.mxu0 %v463
    %638 = vmatpush.bf16.msra.mxu0 %v461
    %639 = vmatpush.bf16.msra.mxu0 %v459
    %640 = vmatpush.bf16.msra.mxu0 %v457
    %641 = vmatpush.bf16.msra.mxu0 %v455
    %642 = vmatmul.bf16.gmra.mxu0 %v164
    %v643 = vpop.f32.mrf.mxu0
    %v644 = vadd.f32 %v630, %v643
    %v645 = vpop.f32.mrf.mxu0
    %v646 = vadd.f32 %v632, %v645
    %647 = vdwg.mxu0
    %648 = vmatpush.bf16.msra.mxu0 %v485
    %649 = vmatpush.bf16.msra.mxu0 %v483
    %650 = vmatpush.bf16.msra.mxu0 %v481
    %651 = vmatpush.bf16.msra.mxu0 %v479
    %652 = vmatpush.bf16.msra.mxu0 %v477
    %653 = vmatpush.bf16.msra.mxu0 %v475
    %654 = vmatpush.bf16.msra.mxu0 %v473
    %655 = vmatpush.bf16.msra.mxu0 %v471
    %656 = vmatmul.bf16.gmra.mxu0 %v165
    %v657 = vpop.f32.mrf.mxu0
    %v658 = vadd.f32 %v644, %v657
    %v659 = vpop.f32.mrf.mxu0
    %v660 = vadd.f32 %v646, %v659
    %661 = vdwg.mxu0
    %v666 = vunpack.c.l.b16 %v142
    %v667 = vunpack.c.h.b16 %v142
    %v668 = vunpack.c.l.b16 %v143
    %v669 = vunpack.c.h.b16 %v143
    %v670 = vunpack.c.l.b16 %v144
    %v671 = vunpack.c.h.b16 %v144
    %v672 = vunpack.c.l.b16 %v145
    %v673 = vunpack.c.h.b16 %v145
    %v674 = vpack.c.b16 %v670, %v666
    %v675 = vpack.c.b16 %v671, %v667
    %v676 = vpack.c.b16 %v672, %v668
    %v677 = vpack.c.b16 %v673, %v669
    %682 = vmatpush.bf16.msra.mxu0 %v436
    %683 = vmatpush.bf16.msra.mxu0 %v434
    %684 = vmatpush.bf16.msra.mxu0 %v432
    %685 = vmatpush.bf16.msra.mxu0 %v430
    %686 = vmatpush.bf16.msra.mxu0 %v428
    %687 = vmatpush.bf16.msra.mxu0 %v426
    %688 = vmatpush.bf16.msra.mxu0 %v424
    %689 = vmatpush.bf16.msra.mxu0 %v422
    %690 = vmatmul.bf16.gmra.mxu0 %v674
    %v691 = vpop.f32.mrf.mxu0
    %v692 = vadd.f32 %v602, %v691
    %v693 = vpop.f32.mrf.mxu0
    %v694 = vadd.f32 %v604, %v693
    %695 = vdwg.mxu0
    %696 = vmatpush.bf16.msra.mxu0 %v452
    %697 = vmatpush.bf16.msra.mxu0 %v450
    %698 = vmatpush.bf16.msra.mxu0 %v448
    %699 = vmatpush.bf16.msra.mxu0 %v446
    %700 = vmatpush.bf16.msra.mxu0 %v444
    %701 = vmatpush.bf16.msra.mxu0 %v442
    %702 = vmatpush.bf16.msra.mxu0 %v440
    %703 = vmatpush.bf16.msra.mxu0 %v438
    %704 = vmatmul.bf16.gmra.mxu0 %v675
    %v705 = vpop.f32.mrf.mxu0
    %v706 = vadd.f32 %v692, %v705
    %v707 = vpop.f32.mrf.mxu0
    %v708 = vadd.f32 %v694, %v707
    %709 = vdwg.mxu0
    %710 = vmatpush.bf16.msra.mxu0 %v468
    %711 = vmatpush.bf16.msra.mxu0 %v466
    %712 = vmatpush.bf16.msra.mxu0 %v464
    %713 = vmatpush.bf16.msra.mxu0 %v462
    %714 = vmatpush.bf16.msra.mxu0 %v460
    %715 = vmatpush.bf16.msra.mxu0 %v458
    %716 = vmatpush.bf16.msra.mxu0 %v456
    %717 = vmatpush.bf16.msra.mxu0 %v454
    %718 = vmatmul.bf16.gmra.mxu0 %v676
    %v719 = vpop.f32.mrf.mxu0
    %v720 = vadd.f32 %v706, %v719
    %v721 = vpop.f32.mrf.mxu0
    %v722 = vadd.f32 %v708, %v721
    %723 = vdwg.mxu0
    %724 = vmatpush.bf16.msra.mxu0 %v484
    %725 = vmatpush.bf16.msra.mxu0 %v482
    %726 = vmatpush.bf16.msra.mxu0 %v480
    %727 = vmatpush.bf16.msra.mxu0 %v478
    %728 = vmatpush.bf16.msra.mxu0 %v476
    %729 = vmatpush.bf16.msra.mxu0 %v474
    %730 = vmatpush.bf16.msra.mxu0 %v472
    %731 = vmatpush.bf16.msra.mxu0 %v470
    %732 = vmatmul.bf16.gmra.mxu0 %v677
    %v733 = vpop.f32.mrf.mxu0
    %v734 = vadd.f32 %v720, %v733
    %v735 = vpop.f32.mrf.mxu0
    %v736 = vadd.f32 %v722, %v735
    %737 = vdwg.mxu0
    %738 = vmatpush.bf16.msra.mxu0 %v437
    %739 = vmatpush.bf16.msra.mxu0 %v435
    %740 = vmatpush.bf16.msra.mxu0 %v433
    %741 = vmatpush.bf16.msra.mxu0 %v431
    %742 = vmatpush.bf16.msra.mxu0 %v429
    %743 = vmatpush.bf16.msra.mxu0 %v427
    %744 = vmatpush.bf16.msra.mxu0 %v425
    %745 = vmatpush.bf16.msra.mxu0 %v423
    %746 = vmatmul.bf16.gmra.mxu0 %v674
    %v747 = vpop.f32.mrf.mxu0
    %v748 = vadd.f32 %v658, %v747
    %v749 = vpop.f32.mrf.mxu0
    %v750 = vadd.f32 %v660, %v749
    %751 = vdwg.mxu0
    %752 = vmatpush.bf16.msra.mxu0 %v453
    %753 = vmatpush.bf16.msra.mxu0 %v451
    %754 = vmatpush.bf16.msra.mxu0 %v449
    %755 = vmatpush.bf16.msra.mxu0 %v447
    %756 = vmatpush.bf16.msra.mxu0 %v445
    %757 = vmatpush.bf16.msra.mxu0 %v443
    %758 = vmatpush.bf16.msra.mxu0 %v441
    %759 = vmatpush.bf16.msra.mxu0 %v439
    %760 = vmatmul.bf16.gmra.mxu0 %v675
    %v761 = vpop.f32.mrf.mxu0
    %v762 = vadd.f32 %v748, %v761
    %v763 = vpop.f32.mrf.mxu0
    %v764 = vadd.f32 %v750, %v763
    %765 = vdwg.mxu0
    %766 = vmatpush.bf16.msra.mxu0 %v469
    %767 = vmatpush.bf16.msra.mxu0 %v467
    %768 = vmatpush.bf16.msra.mxu0 %v465
    %769 = vmatpush.bf16.msra.mxu0 %v463
    %770 = vmatpush.bf16.msra.mxu0 %v461
    %771 = vmatpush.bf16.msra.mxu0 %v459
    %772 = vmatpush.bf16.msra.mxu0 %v457
    %773 = vmatpush.bf16.msra.mxu0 %v455
    %774 = vmatmul.bf16.gmra.mxu0 %v676
    %v775 = vpop.f32.mrf.mxu0
    %v776 = vadd.f32 %v762, %v775
    %v777 = vpop.f32.mrf.mxu0
    %v778 = vadd.f32 %v764, %v777
    %779 = vdwg.mxu0
    %780 = vmatpush.bf16.msra.mxu0 %v485
    %781 = vmatpush.bf16.msra.mxu0 %v483
    %782 = vmatpush.bf16.msra.mxu0 %v481
    %783 = vmatpush.bf16.msra.mxu0 %v479
    %784 = vmatpush.bf16.msra.mxu0 %v477
    %785 = vmatpush.bf16.msra.mxu0 %v475
    %786 = vmatpush.bf16.msra.mxu0 %v473
    %787 = vmatpush.bf16.msra.mxu0 %v471
    %788 = vmatmul.bf16.gmra.mxu0 %v677
    %v789 = vpop.f32.mrf.mxu0
    %v790 = vadd.f32 %v776, %v789
    %v791 = vpop.f32.mrf.mxu0
    %v792 = vadd.f32 %v778, %v791
    %793 = vdwg.mxu0
    %v794 = vstv %s62
    %v795 = vadd.f32 %v734, %v794
    %v796 = vadd.f32 %v790, %v794
    %v797 = vadd.f32 %v736, %v794
    %v798 = vadd.f32 %v792, %v794
    %v799 = vmul.f32 %v795, 0.5
    %v800 = vmul.f32 %v796, 0.5
    %v801 = vmul.f32 %v797, 0.5
    %v802 = vmul.f32 %v798, 0.5
    %v803 = vtanh.pop %v799
    %v804 = vtanh.pop %v800
    %v805 = vtanh.pop %v801
    %v806 = vtanh.pop %v802
    %v807 = vmul.f32 %v803, 0.5
    %v808 = vmul.f32 %v804, 0.5
    %v809 = vmul.f32 %v805, 0.5
    %v810 = vmul.f32 %v806, 0.5
    %v811 = vadd.f32 %v807, 0.5
    %v812 = vadd.f32 %v808, 0.5
    %v813 = vadd.f32 %v809, 0.5
    %v814 = vadd.f32 %v810, 0.5
    %815 = vst [vmem:[#allocation9] sm:$0xff] %v811
    %816 = vst [vmem:[#allocation9 + $0x8] sm:$0xff] %v812
    %817 = vst [vmem:[#allocation9 + $0x10] sm:$0xff] %v813
    %818 = vst [vmem:[#allocation9 + $0x18] sm:$0xff] %v814
    // Predicated region
    $region26: #{tpu_custom_call.1} parent=1 // pred_check
      _
    $region27: #{tpu_custom_call.1} parent=1 // pred_check_branch
      %820 = sbr.rel (0) target = $region29
    $region28: #{tpu_custom_call.1} parent=1 // pred_region
      %822 = vsyncadd [#allocation4], 0
      %s823 = sshll.u32 [#allocation9], 4
      %s824 = int_to_ptr.vmem [resolvable:$true] %s823
      %s825 = sshll.u32 %s3, 4
      %s826 = int_to_ptr.hbm [resolvable:$true] %s825
      %831 = dma.vmem_to_hbm [thread:$0]  %s824, 512, %s826, [#allocation4], 256, 256, 16
    $region29: #{tpu_custom_call.1} parent=1 // pred_fallthru
      _
    // Predicated region
    $region30: #{tpu_custom_call.1} parent=1 // pred_check
      _
    $region31: #{tpu_custom_call.1} parent=1 // pred_check_branch
      %833 = sbr.rel (0) target = $region33
    $region32: #{tpu_custom_call.1} parent=1 // pred_region
      %835 = dma.done [#allocation4], 512
    $region33: #{tpu_custom_call.1} parent=1 // pred_fallthru
      _
    %836 = vsyncpa [#allocation3], 1
    %837 = vsyncpa [#allocation8], 1
    %838 = vsyncpa [#allocation4], 1
    %839 = vsyncpa [#allocation5], 1

</llo_original>
